<compile_context>
chip_gen: v7x
topology: tpu7x:2x2x1
jax: 0.10.0
libtpu: 0.0.40
codegen_flags: <defaults>
</compile_context>

<pallas_src>
import jax
import jax.numpy as jnp
from jax.experimental import pallas as pl
from jax.experimental.pallas import tpu as pltpu

EPS = 1e-6
LANES = 128
MAX_TILE_ROWS = 2048   # per-array tile = 2048*128 elems (1 MiB @ f32); with 3
                       # inputs double-buffered ~6 MiB VMEM -> safe on v7x too.
NCORES = 2             # leading 'parallel' grid axis (megacore split on v7x)


def _cdiv(a, b):
    return (a + b - 1) // b


def _round_up(a, b):
    return _cdiv(a, b) * b


def _dice_partial_kernel(ch0_ref, ch1_ref, tgt_ref, out_ref):
    """Accumulate per-lane partial sums for one (TILE_ROWS, 128) pixel tile.

    out_ref: (1, 8, 128) f32 resident accumulator block (one per core):
      sublane 0 -> partial sum(input)   = sum(ch0) + sum(ch1)
      sublane 1 -> partial intersection = sum(ch0) + sum((ch1 - ch0) * t)
    """
    @pl.when(pl.program_id(1) == 0)
    def _init():
        out_ref[...] = jnp.zeros_like(out_ref)

    ch0 = ch0_ref[...].astype(jnp.float32)
    ch1 = ch1_ref[...].astype(jnp.float32)
    tgt = tgt_ref[...].astype(jnp.float32)

    # Sublane-only reductions; cross-lane reduce + divide done once outside.
    p_in = jnp.sum(ch0 + ch1, axis=0, keepdims=True)                # (1, 128)
    p_ix = jnp.sum(ch0 + (ch1 - ch0) * tgt, axis=0, keepdims=True)  # (1, 128)

    out_ref[0, 0:1, :] += p_in
    out_ref[0, 1:2, :] += p_ix


def dice_loss(input_nchw, target_nhw, eps=EPS):
    """input_nchw: (N, 2, H, W); target_nhw: (N, H, W) -> scalar f32 loss."""
    n, c, h, w = input_nchw.shape
    assert c == 2, "DiceLoss expects a 2-channel input (neg/pos)"
    assert target_nhw.shape == (n, h, w)
    p = n * h * w

    # Channel-blocked, lane-dense layout (no in-kernel deinterleave).
    ch0 = input_nchw[:, 0, :, :].reshape(-1)
    ch1 = input_nchw[:, 1, :, :].reshape(-1)
    tgt = target_nhw.reshape(-1)

    rows = _cdiv(p, LANES)
    tile_rows = min(MAX_TILE_ROWS, _round_up(rows, 8))
    steps = _cdiv(rows, NCORES * tile_rows)
    rows_padded = NCORES * steps * tile_rows
    pad = rows_padded * LANES - p

    def prep(x):
        if pad:
            x = jnp.pad(x, (0, pad))          # zero padding: contributes 0
        return x.reshape(rows_padded, LANES)

    ch0_2d, ch1_2d, tgt_2d = prep(ch0), prep(ch1), prep(tgt)

    tile_spec = pl.BlockSpec(
        (tile_rows, LANES), lambda ci, si, s=steps: (ci * s + si, 0))

    partials = pl.pallas_call(
        _dice_partial_kernel,
        out_shape=jax.ShapeDtypeStruct((NCORES, 8, LANES), jnp.float32),
        grid=(NCORES, steps),
        in_specs=[tile_spec, tile_spec, tile_spec],
        out_specs=pl.BlockSpec((1, 8, LANES), lambda ci, si: (ci, 0, 0)),
        compiler_params=pltpu.CompilerParams(
            dimension_semantics=("parallel", "arbitrary")),
    )(ch0_2d, ch1_2d, tgt_2d)

    sum_input = jnp.sum(partials[:, 0, :])
    intersection = jnp.sum(partials[:, 1, :])
    # sum(stack(1-t, t)) == N*H*W exactly for targets in [0, 1] (binary masks).
    union = sum_input + float(p) + eps
    return 1.0 - 2.0 * intersection / union


def _reference(input_nchw, target_nhw):
    neg = 1.0 - target_nhw
    pos = target_nhw
    tgt = jnp.stack((neg, pos), axis=1)
    intersection = jnp.sum(input_nchw * tgt)
    union = jnp.sum(input_nchw) + jnp.sum(tgt) + EPS
    return 1.0 - 2.0 * intersection / union


if __name__ == "__main__":
    key = jax.random.PRNGKey(0)
    k1, k2 = jax.random.split(key)

    N, C, H, W = 2, 2, 16, 16
    # input: softmax-like probabilities over the 2 channels
    logits = jax.random.normal(k1, (N, C, H, W), dtype=jnp.float32)
    x = jax.nn.softmax(logits, axis=1)
    # target: binary mask
    target = (jax.random.uniform(k2, (N, H, W)) > 0.5).astype(jnp.float32)

    loss = jax.block_until_ready(dice_loss(x, target))
    ref = jax.block_until_ready(_reference(x, target))

    assert jnp.allclose(loss, ref, atol=1e-5, rtol=1e-5), (loss, ref)
    print("KERNEL_OK")
</pallas_src>

<mosaic_0001>
module attributes {stable_mosaic.version = 11 : i64} {
  func.func @_dice_partial_kernel(%arg0: i32, %arg1: i32, %arg2: memref<8x128xf32, #tpu.memory_space<vmem>>, %arg3: memref<8x128xf32, #tpu.memory_space<vmem>>, %arg4: memref<8x128xf32, #tpu.memory_space<vmem>>, %arg5: memref<1x8x128xf32, #tpu.memory_space<vmem>>) attributes {dimension_semantics = [#tpu.dimension_semantics<parallel>, #tpu.dimension_semantics<arbitrary>], iteration_bounds = array<i64: 2, 1>, scalar_prefetch = 0 : i64, scratch_operands = 0 : i64, tpu.core_type = #tpu.core_type<tc>, window_params = [{transform_indices = @transform_0, window_bounds = array<i64: 8, 128>}, {transform_indices = @transform_1, window_bounds = array<i64: 8, 128>}, {transform_indices = @transform_2, window_bounds = array<i64: 8, 128>}, {transform_indices = @transform_3, window_bounds = array<i64: 1, 8, 128>}]} {
    %c0_i32 = arith.constant 0 : i32
    %0 = arith.cmpi eq, %arg1, %c0_i32 : i32
    %1 = arith.extui %0 : i1 to i32
    %c0_i32_0 = arith.constant 0 : i32
    %2 = arith.cmpi ne, %1, %c0_i32_0 : i32
    scf.if %2 {
      %cst_18 = arith.constant 0.000000e+00 : f32
      %26 = vector.broadcast %cst_18 : f32 to vector<1x8x128xf32>
      %c0_19 = arith.constant 0 : index
      %c0_20 = arith.constant 0 : index
      %c0_21 = arith.constant 0 : index
      %27 = vector.load %arg5[%c0_19, %c0_20, %c0_21] : memref<1x8x128xf32, #tpu.memory_space<vmem>>, vector<1x8x128xf32>
      tpu.vector_store %arg5[%c0_19, %c0_20, %c0_21], %26 {strides = array<i32>} : memref<1x8x128xf32, #tpu.memory_space<vmem>>, vector<1x8x128xf32>,
    } else {
    }
    %c0 = arith.constant 0 : index
    %c0_1 = arith.constant 0 : index
    %3 = vector.load %arg2[%c0, %c0_1] : memref<8x128xf32, #tpu.memory_space<vmem>>, vector<8x128xf32>
    %c0_2 = arith.constant 0 : index
    %c0_3 = arith.constant 0 : index
    %4 = vector.load %arg3[%c0_2, %c0_3] : memref<8x128xf32, #tpu.memory_space<vmem>>, vector<8x128xf32>
    %c0_4 = arith.constant 0 : index
    %c0_5 = arith.constant 0 : index
    %5 = vector.load %arg4[%c0_4, %c0_5] : memref<8x128xf32, #tpu.memory_space<vmem>>, vector<8x128xf32>
    %6 = arith.addf %3, %4 : vector<8x128xf32>
    %cst = arith.constant dense<0.000000e+00> : vector<128xf32>
    %7 = vector.multi_reduction <add>, %6, %cst [0] : vector<8x128xf32> to vector<128xf32>
    %8 = vector.shape_cast %7 : vector<128xf32> to vector<1x128xf32>
    %9 = arith.subf %4, %3 : vector<8x128xf32>
    %10 = arith.mulf %9, %5 : vector<8x128xf32>
    %11 = arith.addf %3, %10 : vector<8x128xf32>
    %cst_6 = arith.constant dense<0.000000e+00> : vector<128xf32>
    %12 = vector.multi_reduction <add>, %11, %cst_6 [0] : vector<8x128xf32> to vector<128xf32>
    %13 = vector.shape_cast %12 : vector<128xf32> to vector<1x128xf32>
    %c0_7 = arith.constant 0 : index
    %c0_8 = arith.constant 0 : index
    %c0_9 = arith.constant 0 : index
    %14 = vector.load %arg5[%c0_7, %c0_8, %c0_9] : memref<1x8x128xf32, #tpu.memory_space<vmem>>, vector<1x1x128xf32>
    %15 = vector.shape_cast %14 : vector<1x1x128xf32> to vector<1x128xf32>
    %16 = arith.addf %15, %8 : vector<1x128xf32>
    %c0_10 = arith.constant 0 : index
    %c0_11 = arith.constant 0 : index
    %c0_12 = arith.constant 0 : index
    %17 = vector.load %arg5[%c0_10, %c0_11, %c0_12] : memref<1x8x128xf32, #tpu.memory_space<vmem>>, vector<1x1x128xf32>
    %18 = vector.shape_cast %17 : vector<1x1x128xf32> to vector<1x128xf32>
    %19 = vector.shape_cast %16 : vector<1x128xf32> to vector<1x1x128xf32>
    tpu.vector_store %arg5[%c0_10, %c0_11, %c0_12], %19 {strides = array<i32>} : memref<1x8x128xf32, #tpu.memory_space<vmem>>, vector<1x1x128xf32>,
    %c0_13 = arith.constant 0 : index
    %c1 = arith.constant 1 : index
    %c0_14 = arith.constant 0 : index
    %20 = vector.load %arg5[%c0_13, %c1, %c0_14] : memref<1x8x128xf32, #tpu.memory_space<vmem>>, vector<1x1x128xf32>
    %21 = vector.shape_cast %20 : vector<1x1x128xf32> to vector<1x128xf32>
    %22 = arith.addf %21, %13 : vector<1x128xf32>
    %c0_15 = arith.constant 0 : index
    %c1_16 = arith.constant 1 : index
    %c0_17 = arith.constant 0 : index
    %23 = vector.load %arg5[%c0_15, %c1_16, %c0_17] : memref<1x8x128xf32, #tpu.memory_space<vmem>>, vector<1x1x128xf32>
    %24 = vector.shape_cast %23 : vector<1x1x128xf32> to vector<1x128xf32>
    %25 = vector.shape_cast %22 : vector<1x128xf32> to vector<1x1x128xf32>
    tpu.vector_store %arg5[%c0_15, %c1_16, %c0_17], %25 {strides = array<i32>} : memref<1x8x128xf32, #tpu.memory_space<vmem>>, vector<1x1x128xf32>,
    return
  }
  func.func @transform_0(%arg0: i32, %arg1: i32) -> (i32, i32) {
    %c1_i32 = arith.constant 1 : i32
    %0 = arith.muli %arg0, %c1_i32 : i32
    %1 = arith.addi %0, %arg1 : i32
    %c0_i32 = arith.constant 0 : i32
    %c0_i32_0 = arith.constant 0 : i32
    return %1, %c0_i32 : i32, i32
  }
  func.func @transform_1(%arg0: i32, %arg1: i32) -> (i32, i32) {
    %c1_i32 = arith.constant 1 : i32
    %0 = arith.muli %arg0, %c1_i32 : i32
    %1 = arith.addi %0, %arg1 : i32
    %c0_i32 = arith.constant 0 : i32
    %c0_i32_0 = arith.constant 0 : i32
    return %1, %c0_i32 : i32, i32
  }
  func.func @transform_2(%arg0: i32, %arg1: i32) -> (i32, i32) {
    %c1_i32 = arith.constant 1 : i32
    %0 = arith.muli %arg0, %c1_i32 : i32
    %1 = arith.addi %0, %arg1 : i32
    %c0_i32 = arith.constant 0 : i32
    %c0_i32_0 = arith.constant 0 : i32
    return %1, %c0_i32 : i32, i32
  }
  func.func @transform_3(%arg0: i32, %arg1: i32) -> (i32, i32, i32) {
    %c0_i32 = arith.constant 0 : i32
    %c0_i32_0 = arith.constant 0 : i32
    %c0_i32_1 = arith.constant 0 : i32
    return %arg0, %c0_i32, %c0_i32_0 : i32, i32, i32
  }
}

</mosaic_0001>

<llo_original>
// kernel: tpu_custom_call.1
$region0: #{tpu_custom_call.1}
  #allocation0 [shape = 'u32[]', space=smem, size = 0x4, offset = 0x4, fixed_abs, tag = 'smem constant byte address 0x4 - core index']
  #allocation1 [shape = 'u32[144,128]{1,0:T(1,128)}', space=vmem, size = 0x12000, scoped, tag = 'internal scratch']
  %s0 = inlined_call_operand.hbm [shape: f32[16,128], index: 0, kind: input, shape index: {}]
  %s1 = inlined_call_operand.hbm [shape: f32[16,128], index: 1, kind: input, shape index: {}]
  %s2 = inlined_call_operand.hbm [shape: f32[16,128], index: 2, kind: input, shape index: {}]
  %s3 = inlined_call_operand.hbm [shape: f32[2,8,128], index: 3, kind: output, shape index: {}]
  %s4 = sld [smem:[#allocation0]]
  $region61: #{tpu_custom_call.1} parent=0
    _
  %s6 = ssub.s32 1, %s4
  %s7 = scalar_select 0, %s6, %s4
  $region1: #{tpu_custom_call.1} parent=0
    #allocation2 [shape = 'u8[8192]{0}', space=vmem, size = 0x2000, scoped, tag = 'input window, operand 0']
    #allocation3 [shape = 's32[2]{0}', space=sflag, size = 0x8, scoped, tag = 'scoped memory for tpu_custom_call.1']
    #allocation4 [shape = 's32[2]{0}', space=sflag, size = 0x8, scoped, tag = 'scoped memory for tpu_custom_call.1']
    #allocation5 [shape = 'u8[8192]{0}', space=vmem, size = 0x2000, scoped, tag = 'input window, operand 1']
    #allocation6 [shape = 's32[2]{0}', space=sflag, size = 0x8, scoped, tag = 'scoped memory for tpu_custom_call.1']
    #allocation7 [shape = 'u8[8192]{0}', space=vmem, size = 0x2000, scoped, tag = 'input window, operand 2']
    #allocation8 [shape = 'u8[8192]{0}', space=vmem, size = 0x2000, scoped, tag = 'output window, operand 0']
    %8 = vsyncpa [#allocation3], 0
    %s9 = scalar_lea.sflag [#allocation3], 1
    %10 = vsyncpa %s9, 0
    %11 = vsyncpa [#allocation6], 0
    %s12 = scalar_lea.sflag [#allocation6], 1
    %13 = vsyncpa %s12, 0
    %14 = vsyncpa [#allocation4], 0
    %s15 = scalar_lea.sflag [#allocation4], 1
    %16 = vsyncpa %s15, 0
    loop: start=0, step=1, limit=4
    $region2: #{tpu_custom_call.1} parent=1 // loop_pre_header
      _
    $region3: #{tpu_custom_call.1} parent=1 // loop_header
      %s18 = sphi 0, %s22
      %p19 = scmp.ge.s32.totalorder %s18, 4
      %s25 = sphi 0, %s37
      %s26 = sphi 0, %s33
      %s27 = sphi 0, %s25
      %s28 = sphi 0, %s26
      %s29 = sphi 0, %s27
      %s30 = sphi 0, %s28
      %s42 = sphi 0, %s44
      %s45 = sphi 0, %s42
      %s46 = sphi 0, %s45
      %s62 = sphi 0, %s46
      %s70 = sphi 0, %s72
      %s73 = sphi 0, %s70
      %s74 = sphi 0, %s73
      %s90 = sphi 0, %s74
      %s98 = sphi 0, %s100
      %s101 = sphi 0, %s98
      %s102 = sphi 0, %s101
      %s118 = sphi 0, %s102
      %s124 = sphi 0, %s126
      %s127 = sphi 0, %s124
      %s128 = sphi 0, %s127
      %s144 = sphi 0, %s128
    $region4: #{tpu_custom_call.1} parent=1 // loop_header_branch
      %21 = sbr.rel (%p19) target = $region8
    $region5: #{tpu_custom_call.1} parent=1 // loop_body
      %s23 = ssub.s32 %s18, 1
      %s24 = ssub.s32 %s18, 2
      %s31 = sadd.s32 1, %s26
      %p32 = scmp.ge.s32.totalorder %s31, 1
      %s33 = scalar_select %p32, 0, %s31
      %s34 = sadd.s32 1, %s25
      %s35 = scalar_select %p32, %s34, %s25
      %p36 = scmp.ge.s32.totalorder %s35, 2
      %s37 = scalar_select %p36, 0, %s35
      %s38 = sadd.s32 %s25, %s26
      %s39 = sadd.s32 %s37, %s33
      %s40 = ssub.s32 %s38, %s39
      %p41 = scmp.eq.s32.totalorder %s40, 0
      %s43 = sadd.s32 %s42, 1
      %s44 = scalar_select %p41, %s42, %s43
      %p47 = pneg %p41
      %p48 = scmp.eq.s32.totalorder %s18, 1
      %p49 = por %p47, %p48
      %p50 = scmp.ne.s32.totalorder %s42, %s45
      %p51 = scmp.eq.s32.totalorder %s18, 0
      %p52 = por %p50, %p51
      %p53 = scmp.ne.s32.totalorder %s42, %s45
      %p54 = scmp.eq.s32.totalorder %s23, 1
      %p55 = por %p53, %p54
      %p56 = scmp.ne.s32.totalorder %s45, %s46
      %p57 = scmp.eq.s32.totalorder %s23, 0
      %p58 = por %p56, %p57
      %p59 = scmp.ne.s32.totalorder %s45, %s46
      %p60 = scmp.eq.s32.totalorder %s24, 1
      %p61 = por %p59, %p60
      %p63 = scmp.ne.s32.totalorder %s46, %s62
      %p64 = scmp.eq.s32.totalorder %s24, 0
      %p65 = por %p63, %p64
      %s66 = sadd.s32 %s25, %s26
      %s67 = sadd.s32 %s37, %s33
      %s68 = ssub.s32 %s66, %s67
      %p69 = scmp.eq.s32.totalorder %s68, 0
      %s71 = sadd.s32 %s70, 1
      %s72 = scalar_select %p69, %s70, %s71
      %p75 = pneg %p69
      %p76 = scmp.eq.s32.totalorder %s18, 1
      %p77 = por %p75, %p76
      %p78 = scmp.ne.s32.totalorder %s70, %s73
      %p79 = scmp.eq.s32.totalorder %s18, 0
      %p80 = por %p78, %p79
      %p81 = scmp.ne.s32.totalorder %s70, %s73
      %p82 = scmp.eq.s32.totalorder %s23, 1
      %p83 = por %p81, %p82
      %p84 = scmp.ne.s32.totalorder %s73, %s74
      %p85 = scmp.eq.s32.totalorder %s23, 0
      %p86 = por %p84, %p85
      %p87 = scmp.ne.s32.totalorder %s73, %s74
      %p88 = scmp.eq.s32.totalorder %s24, 1
      %p89 = por %p87, %p88
      %p91 = scmp.ne.s32.totalorder %s74, %s90
      %p92 = scmp.eq.s32.totalorder %s24, 0
      %p93 = por %p91, %p92
      %s94 = sadd.s32 %s25, %s26
      %s95 = sadd.s32 %s37, %s33
      %s96 = ssub.s32 %s94, %s95
      %p97 = scmp.eq.s32.totalorder %s96, 0
      %s99 = sadd.s32 %s98, 1
      %s100 = scalar_select %p97, %s98, %s99
      %p103 = pneg %p97
      %p104 = scmp.eq.s32.totalorder %s18, 1
      %p105 = por %p103, %p104
      %p106 = scmp.ne.s32.totalorder %s98, %s101
      %p107 = scmp.eq.s32.totalorder %s18, 0
      %p108 = por %p106, %p107
      %p109 = scmp.ne.s32.totalorder %s98, %s101
      %p110 = scmp.eq.s32.totalorder %s23, 1
      %p111 = por %p109, %p110
      %p112 = scmp.ne.s32.totalorder %s101, %s102
      %p113 = scmp.eq.s32.totalorder %s23, 0
      %p114 = por %p112, %p113
      %p115 = scmp.ne.s32.totalorder %s101, %s102
      %p116 = scmp.eq.s32.totalorder %s24, 1
      %p117 = por %p115, %p116
      %p119 = scmp.ne.s32.totalorder %s102, %s118
      %p120 = scmp.eq.s32.totalorder %s24, 0
      %p121 = por %p119, %p120
      %s122 = ssub.s32 %s25, %s37
      %p123 = scmp.eq.s32.totalorder %s122, 0
      %s125 = sadd.s32 %s124, 1
      %s126 = scalar_select %p123, %s124, %s125
      %p129 = pneg %p123
      %p130 = scmp.eq.s32.totalorder %s18, 1
      %p131 = por %p129, %p130
      %p132 = scmp.ne.s32.totalorder %s124, %s127
      %p133 = scmp.eq.s32.totalorder %s18, 0
      %p134 = por %p132, %p133
      %p135 = scmp.ne.s32.totalorder %s124, %s127
      %p136 = scmp.eq.s32.totalorder %s23, 1
      %p137 = por %p135, %p136
      %p138 = scmp.ne.s32.totalorder %s127, %s128
      %p139 = scmp.eq.s32.totalorder %s23, 0
      %p140 = por %p138, %p139
      %p141 = scmp.ne.s32.totalorder %s127, %s128
      %p142 = scmp.eq.s32.totalorder %s24, 1
      %p143 = por %p141, %p142
      %p145 = scmp.ne.s32.totalorder %s128, %s144
      %p146 = scmp.eq.s32.totalorder %s24, 0
      %p147 = por %p145, %p146
      %p148 = scmp.le.s32.totalorder 1, %s18
      %p149 = scmp.lt.s32.totalorder %s18, 3
      %p150 = pnand %p148, %p149
      %p151 = pneg %p150
      // Predicated region
      $region9: #{tpu_custom_call.1} parent=5 // pred_check
        _
      $region10: #{tpu_custom_call.1} parent=5 // pred_check_branch
        %153 = sbr.rel (%p150) target = $region12
      $region11: #{tpu_custom_call.1} parent=5 // pred_region
        %s154 = ssub.s32 %s18, 1
      $region12: #{tpu_custom_call.1} parent=5 // pred_fallthru
        _
      %p155 = scmp.lt.s32.totalorder %s18, 2
      // Predicated region
      $region13: #{tpu_custom_call.1} parent=5 // pred_check
        %p156 = pneg %p155
      $region14: #{tpu_custom_call.1} parent=5 // pred_check_branch
        %158 = sbr.rel (%p156) target = $region16
      $region15: #{tpu_custom_call.1} parent=5 // pred_region
        // Predicated region
        $region17: #{tpu_custom_call.1} parent=15 // pred_check
          %p159 = pneg %p52
        $region18: #{tpu_custom_call.1} parent=15 // pred_check_branch
          %161 = sbr.rel (%p159) target = $region20
        $region19: #{tpu_custom_call.1} parent=15 // pred_region
          %s162 = sand.u32 %s42, 1
          %s163 = scalar_lea.sflag [#allocation3], %s162
          %s164 = sand.u32 %s42, 1
          %s165 = smul.addr %s164, 8
          %s166 = scalar_lea.vmem [#allocation2], %s165
          %s167 = sadd.s32 %s25, %s26
          %s169 = ssub.s32 128, 128
          %170 = vsyncadd %s163, %s169
          %s171 = smul.addr %s167, 128
          %s172 = scalar_lea.hbm %s0, %s171
          %s174 = sshll.u32 %s166, 4
          %s175 = int_to_ptr.vmem [resolvable:$true] %s174
          %177 = dma.hbm_to_vmem [thread:$0]  %s172, 128, %s175, %s163
        $region20: #{tpu_custom_call.1} parent=15 // pred_fallthru
          _
        // Predicated region
        $region21: #{tpu_custom_call.1} parent=15 // pred_check
          %p178 = pneg %p80
        $region22: #{tpu_custom_call.1} parent=15 // pred_check_branch
          %180 = sbr.rel (%p178) target = $region24
        $region23: #{tpu_custom_call.1} parent=15 // pred_region
          %s181 = sand.u32 %s18, 1
          %s182 = scalar_lea.sflag [#allocation6], %s181
          %s183 = sand.u32 %s70, 1
          %s184 = smul.addr %s183, 8
          %s185 = scalar_lea.vmem [#allocation5], %s184
          %s186 = sadd.s32 %s25, %s26
          %s188 = ssub.s32 128, 128
          %189 = vsyncadd %s182, %s188
          %s190 = smul.addr %s186, 128
          %s191 = scalar_lea.hbm %s1, %s190
          %s193 = sshll.u32 %s185, 4
          %s194 = int_to_ptr.vmem [resolvable:$true] %s193
          %196 = dma.hbm_to_vmem [thread:$0]  %s191, 128, %s194, %s182
        $region24: #{tpu_custom_call.1} parent=15 // pred_fallthru
          _
        // Predicated region
        $region25: #{tpu_custom_call.1} parent=15 // pred_check
          %p197 = pneg %p108
        $region26: #{tpu_custom_call.1} parent=15 // pred_check_branch
          %199 = sbr.rel (%p197) target = $region28
        $region27: #{tpu_custom_call.1} parent=15 // pred_region
          %s200 = sand.u32 %s18, 1
          %s201 = scalar_lea.sflag [#allocation6], %s200
          %s202 = sand.u32 %s98, 1
          %s203 = smul.addr %s202, 8
          %s204 = scalar_lea.vmem [#allocation7], %s203
          %s205 = sadd.s32 %s25, %s26
          %s207 = ssub.s32 128, 128
          %208 = vsyncadd %s201, %s207
          %s209 = smul.addr %s205, 128
          %s210 = scalar_lea.hbm %s2, %s209
          %s212 = sshll.u32 %s204, 4
          %s213 = int_to_ptr.vmem [resolvable:$true] %s212
          %215 = dma.hbm_to_vmem [thread:$0]  %s210, 128, %s213, %s201
        $region28: #{tpu_custom_call.1} parent=15 // pred_fallthru
          _
      $region16: #{tpu_custom_call.1} parent=5 // pred_fallthru
        _
      %p216 = scmp.le.s32.totalorder 1, %s18
      %p217 = scmp.lt.s32.totalorder %s18, 3
      %p218 = pnand %p216, %p217
      %p219 = pneg %p218
      // Predicated region
      $region29: #{tpu_custom_call.1} parent=5 // pred_check
        _
      $region30: #{tpu_custom_call.1} parent=5 // pred_check_branch
        %221 = sbr.rel (%p218) target = $region32
      $region31: #{tpu_custom_call.1} parent=5 // pred_region
        %s222 = ssub.s32 %s18, 1
        %s223 = sand.u32 %s45, 1
        %s224 = scalar_lea.sflag [#allocation3], %s223
        %s225 = sand.u32 %s45, 1
        %s226 = smul.addr %s225, 8
        %s227 = scalar_lea.vmem [#allocation2], %s226
        // Predicated region
        $region33: #{tpu_custom_call.1} parent=31 // pred_check
          %p228 = pneg %p58
        $region34: #{tpu_custom_call.1} parent=31 // pred_check_branch
          %230 = sbr.rel (%p228) target = $region36
        $region35: #{tpu_custom_call.1} parent=31 // pred_region
          %231 = dma.done %s224, 128
        $region36: #{tpu_custom_call.1} parent=31 // pred_fallthru
          _
        %s232 = sand.u32 %s23, 1
        %s233 = scalar_lea.sflag [#allocation6], %s232
        %s234 = sand.u32 %s73, 1
        %s235 = smul.addr %s234, 8
        %s236 = scalar_lea.vmem [#allocation5], %s235
        // Predicated region
        $region37: #{tpu_custom_call.1} parent=31 // pred_check
          %p237 = pneg %p86
        $region38: #{tpu_custom_call.1} parent=31 // pred_check_branch
          %239 = sbr.rel (%p237) target = $region40
        $region39: #{tpu_custom_call.1} parent=31 // pred_region
          %240 = dma.done %s233, 128
        $region40: #{tpu_custom_call.1} parent=31 // pred_fallthru
          _
        %s241 = sand.u32 %s23, 1
        %s242 = scalar_lea.sflag [#allocation6], %s241
        %s243 = sand.u32 %s101, 1
        %s244 = smul.addr %s243, 8
        %s245 = scalar_lea.vmem [#allocation7], %s244
        // Predicated region
        $region41: #{tpu_custom_call.1} parent=31 // pred_check
          %p246 = pneg %p114
        $region42: #{tpu_custom_call.1} parent=31 // pred_check_branch
          %248 = sbr.rel (%p246) target = $region44
        $region43: #{tpu_custom_call.1} parent=31 // pred_region
          %249 = dma.done %s242, 128
        $region44: #{tpu_custom_call.1} parent=31 // pred_fallthru
          _
        %s250 = sand.u32 %s45, 1
        %s251 = scalar_lea.sflag [#allocation3], %s250
        %s252 = sand.u32 %s45, 1
        %s253 = smul.addr %s252, 8
        %s254 = scalar_lea.vmem [#allocation2], %s253
        %p255 = pneg %p58
        %p256 = pneg %p55
        %s257 = sand.u32 %s23, 1
        %s258 = scalar_lea.sflag [#allocation6], %s257
        %s259 = sand.u32 %s73, 1
        %s260 = smul.addr %s259, 8
        %s261 = scalar_lea.vmem [#allocation5], %s260
        %p262 = pneg %p86
        %p263 = pneg %p83
        %s264 = sand.u32 %s23, 1
        %s265 = scalar_lea.sflag [#allocation6], %s264
        %s266 = sand.u32 %s101, 1
        %s267 = smul.addr %s266, 8
        %s268 = scalar_lea.vmem [#allocation7], %s267
        %p269 = pneg %p114
        %p270 = pneg %p111
        %p271 = pneg %p140
        %p272 = pneg %p137
        %s273 = sand.u32 %s127, 1
        %s274 = scalar_lea.sflag [#allocation4], %s273
        %s275 = sand.u32 %s127, 1
        %s276 = smul.addr %s275, 8
        %s277 = scalar_lea.vmem [#allocation8], %s276
        %s278 = sadd.s32 %s27, %s28
        %s279 = sadd.s32 %s27, %s28
        %s280 = sadd.s32 %s27, %s28
        %p281 = scmp.eq.s32.totalorder %s28, 0
        // Predicated region
        $region45: #{tpu_custom_call.1} parent=31 // pred_check
          %p282 = pneg %p281
        $region46: #{tpu_custom_call.1} parent=31 // pred_check_branch
          %284 = sbr.rel (%p282) target = $region48
        $region47: #{tpu_custom_call.1} parent=31 // pred_region
          %285 = vst [vmem:[%s277] sm:$0xff] 0.0
        $region48: #{tpu_custom_call.1} parent=31 // pred_fallthru
          _
        %v286 = vld [vmem:[%s227] sm:$0xff]
        %v287 = vld [vmem:[%s236] sm:$0xff]
        %v288 = vld [vmem:[%s245] sm:$0xff]
        %v289 = vadd.f32 %v286, %v287
        %v290 = vrot.slane %v289, 4
        %v291 = vadd.f32 %v289, %v290
        %v292 = vrot.slane %v291, 2
        %v293 = vadd.f32 %v291, %v292
        %v294 = vrot.slane %v293, 1
        %v295 = vadd.f32 %v293, %v294
        %v296 = vsub.f32 %v287, %v286
        %v297 = vmul.f32 %v296, %v288
        %v298 = vadd.f32 %v286, %v297
        %v299 = vrot.slane %v298, 4
        %v300 = vadd.f32 %v298, %v299
        %v301 = vrot.slane %v300, 2
        %v302 = vadd.f32 %v300, %v301
        %v303 = vrot.slane %v302, 1
        %v304 = vadd.f32 %v302, %v303
        %v305 = vld [vmem:[%s277] sm:$0x1]
        %v306 = vadd.f32 %v305, %v295
        %307 = vst [vmem:[%s277] sm:$0x1] %v306
        %v308 = vld [vmem:[%s277 + $0x1] sm:$0x1]
        %v309 = vadd.f32 %v308, %v304
        %310 = vst [vmem:[%s277 + $0x1] sm:$0x1] %v309
        %s311 = sand.u32 %s127, 1
        %s312 = scalar_lea.sflag [#allocation4], %s311
        %s313 = sand.u32 %s127, 1
        %s314 = smul.addr %s313, 8
        %s315 = scalar_lea.vmem [#allocation8], %s314
        // Predicated region
        $region49: #{tpu_custom_call.1} parent=31 // pred_check
          %p316 = pneg %p137
        $region50: #{tpu_custom_call.1} parent=31 // pred_check_branch
          %318 = sbr.rel (%p316) target = $region52
        $region51: #{tpu_custom_call.1} parent=31 // pred_region
          %s320 = ssub.s32 128, 128
          %321 = vsyncadd %s312, %s320
          %s322 = smul.addr %s27, 128
          %s323 = scalar_lea.hbm %s3, %s322
          %s325 = sshll.u32 %s315, 4
          %s326 = int_to_ptr.vmem [resolvable:$true] %s325
          %328 = dma.vmem_to_hbm [thread:$0]  %s326, 128, %s323, %s312
        $region52: #{tpu_custom_call.1} parent=31 // pred_fallthru
          _
      $region32: #{tpu_custom_call.1} parent=5 // pred_fallthru
        _
      %p329 = scmp.le.s32.totalorder 2, %s18
      // Predicated region
      $region53: #{tpu_custom_call.1} parent=5 // pred_check
        %p330 = pneg %p329
      $region54: #{tpu_custom_call.1} parent=5 // pred_check_branch
        %332 = sbr.rel (%p330) target = $region56
      $region55: #{tpu_custom_call.1} parent=5 // pred_region
        %s333 = ssub.s32 %s18, 2
        // Predicated region
        $region57: #{tpu_custom_call.1} parent=55 // pred_check
          %p334 = pneg %p143
        $region58: #{tpu_custom_call.1} parent=55 // pred_check_branch
          %336 = sbr.rel (%p334) target = $region60
        $region59: #{tpu_custom_call.1} parent=55 // pred_region
          %s337 = sand.u32 %s128, 1
          %s338 = scalar_lea.sflag [#allocation4], %s337
          %s339 = sand.u32 %s128, 1
          %s340 = smul.addr %s339, 8
          %s341 = scalar_lea.vmem [#allocation8], %s340
          %342 = dma.done %s338, 128
        $region60: #{tpu_custom_call.1} parent=55 // pred_fallthru
          _
      $region56: #{tpu_custom_call.1} parent=5 // pred_fallthru
        _
    $region6: #{tpu_custom_call.1} parent=1 // loop_footer
      %s22 = sadd.s32 1, %s18
    $region7: #{tpu_custom_call.1} parent=1 // loop_footer_branch
      %17 = sbr.rel target = $region3
    $region8: #{tpu_custom_call.1} parent=1 // loop_exit
      _
    %343 = vsyncpa [#allocation3], 1
    %s344 = scalar_lea.sflag [#allocation3], 1
    %345 = vsyncpa %s344, 1
    %346 = vsyncpa [#allocation6], 1
    %s347 = scalar_lea.sflag [#allocation6], 1
    %348 = vsyncpa %s347, 1
    %349 = vsyncpa [#allocation4], 1
    %s350 = scalar_lea.sflag [#allocation4], 1
    %351 = vsyncpa %s350, 1

</llo_original>
